<compile_context>
chip_gen: v7x
topology: tpu7x:2x2x1
jax: 0.10.0
libtpu: 0.0.40
codegen_flags: <defaults>
</compile_context>

<pallas_src>
import jax
import jax.numpy as jnp
from jax.experimental import pallas as pl
from jax.experimental.pallas import tpu as pltpu

_LANE = 128
# Max batch tile: ~192*tile_b B pipeline footprint -> ~25 MiB at 128K, which
# fits v7x's 64 MiB physical (32 MiB scoped default raised below) and leaves
# double-buffering headroom on v5e/v6e.
_MAX_TILE_B = 128 * 1024


def actor_net_kernel(st_ref, w1t_ref, b1c_ref, w2_ref, b2c_ref, out_ref):
    # ---- layer 1 on the MXU: (H, 4) @ (4, TB) -> (H, TB), f32 accumulate ----
    h = jnp.dot(w1t_ref[...], st_ref[...], preferred_element_type=jnp.float32)
    # Bias (H, 1) lane-broadcasts; ReLU on the VPU.  Stays f32 for exact
    # parity with the torch module (bf16 MXU inputs would be free slack on
    # v6e/v7x if ~1e-3 rel tol were acceptable).
    h = jnp.maximum(h + b1c_ref[...], 0.0)

    # ---- layer 2 (H -> 2) on the VPU/XLU ----
    # M=2 is far too small for the MXU; do broadcast-mul + sublane reductions
    # and store each output row directly (out_dim is static -> loop unrolls,
    # no concatenate -> no (2, TB) relayout copy through VMEM).
    w2 = w2_ref[...]                                  # (H, out_dim), tiny
    b2 = b2c_ref[...]                                 # (out_dim, 1)
    for j in range(out_ref.shape[0]):
        col = jnp.sum(h * w2[:, j:j + 1], axis=0, keepdims=True)   # (1, TB)
        out_ref[j:j + 1, :] = (col + b2[j:j + 1, :]).astype(out_ref.dtype)


def _pick_tiling(batch, tile_b):
    """Pick (tile_b, padded_batch): lane-aligned, VMEM-safe, >=2 grid steps."""
    tile_b = max(_LANE, min(_MAX_TILE_B, (int(tile_b) // _LANE) * _LANE))
    b_aligned = pl.cdiv(batch, _LANE) * _LANE
    if b_aligned <= _LANE:
        return _LANE, _LANE
    # At least 2 grid steps so the "parallel" batch axis actually lands on both
    # TensorCores on v7x (harmless ~0.35us extra on single-TC v5e/v6e).
    n_steps = max(2, pl.cdiv(b_aligned, tile_b))
    tile_b = pl.cdiv(pl.cdiv(b_aligned, n_steps), _LANE) * _LANE
    return tile_b, n_steps * tile_b


def _actor_net_pallas(st, w1, b1, w2, b2, tile_b):
    """st: (in_dim, b_pad) with b_pad % tile_b == 0  ->  (out_dim, b_pad)."""
    in_dim, b_pad = st.shape
    H = w1.shape[1]
    out_dim = w2.shape[1]
    grid = (b_pad // tile_b,)

    # Tiny parameter re-layouts (negligible HBM traffic).
    w1t = w1.T                                   # (H, in_dim)
    b1c = b1.reshape(H, 1)                       # (H, 1)
    b2c = b2.reshape(out_dim, 1)                 # (out_dim, 1)

    # Per-step footprint: st block (4->8 sublanes, TB) f32 = 32*TB, x2 buffers;
    # out block (2->8, TB) = 32*TB, x2; hidden (H=16, TB) f32 intermediate
    # = 64*TB; weights negligible  ->  ~192*TB bytes.  280*TB gives headroom.
    vmem_limit = int(min(max(32 << 20, 280 * tile_b), 56 << 20))

    return pl.pallas_call(
        actor_net_kernel,
        out_shape=jax.ShapeDtypeStruct((out_dim, b_pad), st.dtype),
        grid=grid,
        in_specs=[
            # Batch-tiled, lane-dense input: auto double-buffered per grid step.
            pl.BlockSpec((in_dim, tile_b), lambda i: (0, i)),
            # Weights / biases: constant index_map -> stay VMEM-resident.
            pl.BlockSpec((H, in_dim), lambda i: (0, 0)),
            pl.BlockSpec((H, 1), lambda i: (0, 0)),
            pl.BlockSpec((H, out_dim), lambda i: (0, 0)),
            pl.BlockSpec((out_dim, 1), lambda i: (0, 0)),
        ],
        out_specs=pl.BlockSpec((out_dim, tile_b), lambda i: (0, i)),
        compiler_params=pltpu.CompilerParams(
            # Batch axis is embarrassingly parallel -> both TCs on v7x.
            dimension_semantics=("parallel",),
            vmem_limit_bytes=vmem_limit,
        ),
        cost_estimate=pl.CostEstimate(
            flops=12 * H * b_pad,                       # 8H (L1) + 4H (L2) /elem
            transcendentals=0,
            bytes_accessed=(in_dim + out_dim) * 4 * b_pad
            + 4 * (H * in_dim + H + H * out_dim + out_dim),
        ),
    )(st, w1t, b1c, w2, b2c)


def actor_net_forward_feature_major(st, w1, b1, w2, b2, *, tile_b=32768):
    """Feature-major entry point: st is (4, B), returns (2, B).

    No wrapper transposes -> minimal HBM traffic (24 B/batch element).
    """
    in_dim, B = st.shape
    tile_b, b_pad = _pick_tiling(B, tile_b)
    if b_pad != B:
        st = jnp.pad(st, ((0, 0), (0, b_pad - B)))
    out = _actor_net_pallas(st, w1, b1, w2, b2, tile_b)
    # Padded (zero) columns evaluate to relu(b1) @ w2 + b2 != 0, so the slice
    # back to B must stay.
    return out[:, :B]


def actor_net_forward(s, w1, b1, w2, b2, *, tile_b=32768):
    """s: (B, 4); w1: (4, H); b1: (1, H); w2: (H, 2); b2: (1, 2) -> (B, 2).

    Same math as nn.Linear(4, H) -> ReLU -> nn.Linear(H, 2) with weights stored
    as (in_features, out_features):  o = relu(s @ w1 + b1) @ w2 + b2.
    """
    # TODO(synk): callers that can adopt a (features, batch) layout should use
    # actor_net_forward_feature_major directly; the transposes below add an
    # extra HBM read+write pass on an already memory-bound op.
    out_t = actor_net_forward_feature_major(s.T, w1, b1, w2, b2, tile_b=tile_b)
    return out_t.T                               # back to (B, out_dim)


def init_params(key, hidden_dim=16, in_dim=4, out_dim=2, dtype=jnp.float32):
    # Deterministic synthetic init (PyTorch-Linear-style uniform bounds).
    k1, k2, k3, k4 = jax.random.split(key, 4)
    bound1 = 1.0 / jnp.sqrt(in_dim)
    bound2 = 1.0 / jnp.sqrt(hidden_dim)
    w1 = jax.random.uniform(k1, (in_dim, hidden_dim), dtype, -bound1, bound1)
    b1 = jax.random.uniform(k2, (1, hidden_dim), dtype, -bound1, bound1)
    w2 = jax.random.uniform(k3, (hidden_dim, out_dim), dtype, -bound2, bound2)
    b2 = jax.random.uniform(k4, (1, out_dim), dtype, -bound2, bound2)
    return w1, b1, w2, b2


if __name__ == "__main__":
    key = jax.random.PRNGKey(0)
    k_in, k_par = jax.random.split(key)

    batch = 8
    hidden_dim = 16
    s = jax.random.normal(k_in, (batch, 4), jnp.float32)
    w1, b1, w2, b2 = init_params(k_par, hidden_dim=hidden_dim)

    out = jax.block_until_ready(actor_net_forward(s, w1, b1, w2, b2))

    # Pure-JAX reference check of the forward-pass semantics.
    ref = jnp.maximum(s @ w1 + b1, 0.0) @ w2 + b2
    assert out.shape == (batch, 2)
    assert jnp.allclose(out, ref, atol=1e-5, rtol=1e-5)

    # Exercise the multi-tile (grid >= 2) + padding path as well.
    big = 1000
    s_big = jax.random.normal(k_in, (big, 4), jnp.float32)
    out_big = jax.block_until_ready(actor_net_forward(s_big, w1, b1, w2, b2))
    ref_big = jnp.maximum(s_big @ w1 + b1, 0.0) @ w2 + b2
    assert out_big.shape == (big, 2)
    assert jnp.allclose(out_big, ref_big, atol=1e-5, rtol=1e-5)

    # Feature-major (transpose-free) entry point.
    out_fm = jax.block_until_ready(
        actor_net_forward_feature_major(s_big.T, w1, b1, w2, b2))
    assert out_fm.shape == (2, big)
    assert jnp.allclose(out_fm.T, ref_big, atol=1e-5, rtol=1e-5)

    print("KERNEL_OK")
</pallas_src>

<mosaic_0001>
module attributes {stable_mosaic.version = 11 : i64} {
  func.func @actor_net_kernel(%arg0: i32, %arg1: memref<4x128xf32, #tpu.memory_space<vmem>>, %arg2: memref<16x4xf32, #tpu.memory_space<vmem>>, %arg3: memref<16x1xf32, #tpu.memory_space<vmem>>, %arg4: memref<16x2xf32, #tpu.memory_space<vmem>>, %arg5: memref<2x1xf32, #tpu.memory_space<vmem>>, %arg6: memref<2x128xf32, #tpu.memory_space<vmem>>) attributes {dimension_semantics = [#tpu.dimension_semantics<parallel>], iteration_bounds = array<i64: 1>, scalar_prefetch = 0 : i64, scratch_operands = 0 : i64, tpu.core_type = #tpu.core_type<tc>, window_params = [{transform_indices = @transform_0, window_bounds = array<i64: 4, 128>}, {pipeline_mode = #tpu.pipeline_mode<synchronous>, transform_indices = @transform_1, window_bounds = array<i64: 16, 4>}, {pipeline_mode = #tpu.pipeline_mode<synchronous>, transform_indices = @transform_2, window_bounds = array<i64: 16, 1>}, {pipeline_mode = #tpu.pipeline_mode<synchronous>, transform_indices = @transform_3, window_bounds = array<i64: 16, 2>}, {pipeline_mode = #tpu.pipeline_mode<synchronous>, transform_indices = @transform_4, window_bounds = array<i64: 2, 1>}, {transform_indices = @transform_5, window_bounds = array<i64: 2, 128>}]} {
    %c0 = arith.constant 0 : index
    %c0_0 = arith.constant 0 : index
    %0 = vector.load %arg2[%c0, %c0_0] : memref<16x4xf32, #tpu.memory_space<vmem>>, vector<16x4xf32>
    %c0_1 = arith.constant 0 : index
    %c0_2 = arith.constant 0 : index
    %1 = vector.load %arg1[%c0_1, %c0_2] : memref<4x128xf32, #tpu.memory_space<vmem>>, vector<4x128xf32>
    %cst = arith.constant dense<0.000000e+00> : vector<16x128xf32>
    %2 = tpu.matmul %0, %1, %cst {dimension_numbers = #tpu.dot_dimension_numbers<[1], [0], [0], [1], [0, 0, 1, 1], [], []>} : vector<16x4xf32>, vector<4x128xf32>, vector<16x128xf32> -> vector<16x128xf32>
    %c0_3 = arith.constant 0 : index
    %c0_4 = arith.constant 0 : index
    %3 = vector.load %arg3[%c0_3, %c0_4] : memref<16x1xf32, #tpu.memory_space<vmem>>, vector<16x1xf32>
    %4 = vector.broadcast %3 : vector<16x1xf32> to vector<16x128xf32>
    %5 = arith.addf %2, %4 : vector<16x128xf32>
    %cst_5 = arith.constant 0.000000e+00 : f32
    %6 = vector.broadcast %cst_5 : f32 to vector<16x128xf32>
    %7 = arith.maximumf %5, %6 : vector<16x128xf32>
    %c0_6 = arith.constant 0 : index
    %c0_7 = arith.constant 0 : index
    %8 = vector.load %arg4[%c0_6, %c0_7] : memref<16x2xf32, #tpu.memory_space<vmem>>, vector<16x2xf32>
    %c0_8 = arith.constant 0 : index
    %c0_9 = arith.constant 0 : index
    %9 = vector.load %arg5[%c0_8, %c0_9] : memref<2x1xf32, #tpu.memory_space<vmem>>, vector<2x1xf32>
    %10 = vector.extract_strided_slice %8 {offsets = [0, 0], sizes = [16, 1], strides = [1, 1]} : vector<16x2xf32> to vector<16x1xf32>
    %11 = vector.broadcast %10 : vector<16x1xf32> to vector<16x128xf32>
    %12 = arith.mulf %7, %11 : vector<16x128xf32>
    %cst_10 = arith.constant dense<0.000000e+00> : vector<128xf32>
    %13 = vector.multi_reduction <add>, %12, %cst_10 [0] : vector<16x128xf32> to vector<128xf32>
    %14 = vector.shape_cast %13 : vector<128xf32> to vector<1x128xf32>
    %15 = vector.extract_strided_slice %9 {offsets = [0, 0], sizes = [1, 1], strides = [1, 1]} : vector<2x1xf32> to vector<1x1xf32>
    %16 = vector.broadcast %15 : vector<1x1xf32> to vector<1x128xf32>
    %17 = arith.addf %14, %16 : vector<1x128xf32>
    %c0_11 = arith.constant 0 : index
    %c0_12 = arith.constant 0 : index
    %18 = vector.load %arg6[%c0_11, %c0_12] : memref<2x128xf32, #tpu.memory_space<vmem>>, vector<1x128xf32>
    tpu.vector_store %arg6[%c0_11, %c0_12], %17 {strides = array<i32>} : memref<2x128xf32, #tpu.memory_space<vmem>>, vector<1x128xf32>,
    %19 = vector.extract_strided_slice %8 {offsets = [0, 1], sizes = [16, 1], strides = [1, 1]} : vector<16x2xf32> to vector<16x1xf32>
    %20 = vector.broadcast %19 : vector<16x1xf32> to vector<16x128xf32>
    %21 = arith.mulf %7, %20 : vector<16x128xf32>
    %cst_13 = arith.constant dense<0.000000e+00> : vector<128xf32>
    %22 = vector.multi_reduction <add>, %21, %cst_13 [0] : vector<16x128xf32> to vector<128xf32>
    %23 = vector.shape_cast %22 : vector<128xf32> to vector<1x128xf32>
    %24 = vector.extract_strided_slice %9 {offsets = [1, 0], sizes = [1, 1], strides = [1, 1]} : vector<2x1xf32> to vector<1x1xf32>
    %25 = vector.broadcast %24 : vector<1x1xf32> to vector<1x128xf32>
    %26 = arith.addf %23, %25 : vector<1x128xf32>
    %c1 = arith.constant 1 : index
    %c0_14 = arith.constant 0 : index
    %27 = vector.load %arg6[%c1, %c0_14] : memref<2x128xf32, #tpu.memory_space<vmem>>, vector<1x128xf32>
    tpu.vector_store %arg6[%c1, %c0_14], %26 {strides = array<i32>} : memref<2x128xf32, #tpu.memory_space<vmem>>, vector<1x128xf32>,
    return
  }
  func.func @transform_0(%arg0: i32) -> (i32, i32) {
    %c0_i32 = arith.constant 0 : i32
    %c0_i32_0 = arith.constant 0 : i32
    return %c0_i32, %arg0 : i32, i32
  }
  func.func @transform_1(%arg0: i32) -> (i32, i32) {
    %c0_i32 = arith.constant 0 : i32
    %c0_i32_0 = arith.constant 0 : i32
    %c0_i32_1 = arith.constant 0 : i32
    return %c0_i32, %c0_i32_0 : i32, i32
  }
  func.func @transform_2(%arg0: i32) -> (i32, i32) {
    %c0_i32 = arith.constant 0 : i32
    %c0_i32_0 = arith.constant 0 : i32
    %c0_i32_1 = arith.constant 0 : i32
    return %c0_i32, %c0_i32_0 : i32, i32
  }
  func.func @transform_3(%arg0: i32) -> (i32, i32) {
    %c0_i32 = arith.constant 0 : i32
    %c0_i32_0 = arith.constant 0 : i32
    %c0_i32_1 = arith.constant 0 : i32
    return %c0_i32, %c0_i32_0 : i32, i32
  }
  func.func @transform_4(%arg0: i32) -> (i32, i32) {
    %c0_i32 = arith.constant 0 : i32
    %c0_i32_0 = arith.constant 0 : i32
    %c0_i32_1 = arith.constant 0 : i32
    return %c0_i32, %c0_i32_0 : i32, i32
  }
  func.func @transform_5(%arg0: i32) -> (i32, i32) {
    %c0_i32 = arith.constant 0 : i32
    %c0_i32_0 = arith.constant 0 : i32
    return %c0_i32, %arg0 : i32, i32
  }
}

</mosaic_0001>

<llo_original>
// kernel: tpu_custom_call.1
$region0: #{tpu_custom_call.1}
  #allocation0 [shape = 'u32[]', space=smem, size = 0x4, offset = 0x4, fixed_abs, tag = 'smem constant byte address 0x4 - core index']
  #allocation1 [shape = 'u32[144,128]{1,0:T(1,128)}', space=vmem, size = 0x12000, scoped, tag = 'internal scratch']
  %s0 = inlined_call_operand.vmem [shape: f32[4,128], index: 0, kind: input, shape index: {}]
  %s1 = inlined_call_operand.vmem [shape: f32[16,4], index: 1, kind: input, shape index: {}]
  %s2 = inlined_call_operand.vmem [shape: f32[16,1], index: 2, kind: input, shape index: {}]
  %s3 = inlined_call_operand.vmem [shape: f32[16,2], index: 3, kind: input, shape index: {}]
  %s4 = inlined_call_operand.vmem [shape: f32[2,1], index: 4, kind: input, shape index: {}]
  %s5 = inlined_call_operand.hbm [shape: f32[2,128], index: 5, kind: output, shape index: {}]
  %s6 = sld [smem:[#allocation0]]
  $region30: #{tpu_custom_call.1} parent=0
    _
  %s8 = ssub.s32 1, %s6
  %s9 = scalar_select 0, %s8, %s6
  $region1: #{tpu_custom_call.1} parent=0
    #allocation2 [shape = 'u8[1024]{0}', space=vmem, size = 0x400, scoped, tag = 'output window, operand 0, single buffered']
    #allocation3 [shape = 's32[1]{0}', space=sflag, size = 0x4, scoped, tag = 'scoped memory for tpu_custom_call.1']
    %10 = vsyncpa [#allocation3], 0
    // Predicated region
    $region2: #{tpu_custom_call.1} parent=1 // pred_check
      _
    $region3: #{tpu_custom_call.1} parent=1 // pred_check_branch
      %12 = sbr.rel (0) target = $region5
    $region4: #{tpu_custom_call.1} parent=1 // pred_region
      _
    $region5: #{tpu_custom_call.1} parent=1 // pred_fallthru
      _
    // Predicated region
    $region6: #{tpu_custom_call.1} parent=1 // pred_check
      _
    $region7: #{tpu_custom_call.1} parent=1 // pred_check_branch
      %14 = sbr.rel (0) target = $region9
    $region8: #{tpu_custom_call.1} parent=1 // pred_region
      _
    $region9: #{tpu_custom_call.1} parent=1 // pred_fallthru
      _
    // Predicated region
    $region10: #{tpu_custom_call.1} parent=1 // pred_check
      _
    $region11: #{tpu_custom_call.1} parent=1 // pred_check_branch
      %16 = sbr.rel (0) target = $region13
    $region12: #{tpu_custom_call.1} parent=1 // pred_region
      _
    $region13: #{tpu_custom_call.1} parent=1 // pred_fallthru
      _
    // Predicated region
    $region14: #{tpu_custom_call.1} parent=1 // pred_check
      _
    $region15: #{tpu_custom_call.1} parent=1 // pred_check_branch
      %18 = sbr.rel (0) target = $region17
    $region16: #{tpu_custom_call.1} parent=1 // pred_region
      _
    $region17: #{tpu_custom_call.1} parent=1 // pred_fallthru
      _
    // Predicated region
    $region18: #{tpu_custom_call.1} parent=1 // pred_check
      _
    $region19: #{tpu_custom_call.1} parent=1 // pred_check_branch
      %20 = sbr.rel (0) target = $region21
    $region20: #{tpu_custom_call.1} parent=1 // pred_region
      _
    $region21: #{tpu_custom_call.1} parent=1 // pred_fallthru
      _
    %v21 = vld [vmem:[%s1] sm:$0xff]
    %v22 = vld [vmem:[%s1 + $0x8] sm:$0xff]
    %v23 = vld [vmem:[%s0] sm:$0xf]
    %v24 = vld [vmem:[%s2] sm:$0xff]
    %v25 = vld [vmem:[%s2 + $0x8] sm:$0xff]
    %27 = vset.pattern.permute.xlu0 0
    %28 = vperm.xlu0 %27, %v24
    %v29 = vpop.permute.xlu0 %28
    %32 = vset.pattern.permute.xlu0 0
    %33 = vperm.xlu0 %32, %v25
    %v34 = vpop.permute.xlu0 %33
    %vm36 = vcmask 31744
    %v38 = vsel %vm36, %v21, 0
    %v41 = vsel %vm36, %v22, 0
    %vm43 = vcmask 1043456
    %v45 = vsel %vm43, %v23, 0
    %47 = vmatprep.subr.mxu0 0.0
    %48 = vmatpush1.msra.mxu0 %v45
    %49 = vmatprep.subr.mxu0 0.0
    %50 = vmatpush1.msra.mxu0 0.0
    %51 = vmatprep.subr.mxu0 0.0
    %52 = vmatpush1.msra.mxu0 0.0
    %53 = vmatprep.subr.mxu0 0.0
    %54 = vmatpush1.msra.mxu0 0.0
    %55 = vmatprep.subr.mxu0 0.0
    %56 = vmatpush1.msra.mxu0 0.0
    %57 = vmatprep.subr.mxu0 0.0
    %58 = vmatpush1.msra.mxu0 0.0
    %59 = vmatprep.subr.mxu0 0.0
    %60 = vmatpush1.msra.mxu0 0.0
    %61 = vmatprep.subr.mxu0 0.0
    %62 = vmatpush1.msra.mxu0 0.0
    %63 = vmatprep.subr.mxu0 0.0
    %64 = vmatpush1.msra.mxu0 0.0
    %65 = vmatprep.subr.mxu0 0.0
    %66 = vmatpush1.msra.mxu0 0.0
    %67 = vmatprep.subr.mxu0 0.0
    %68 = vmatpush1.msra.mxu0 0.0
    %69 = vmatprep.subr.mxu0 0.0
    %70 = vmatpush1.msra.mxu0 0.0
    %71 = vmatprep.subr.mxu0 0.0
    %72 = vmatpush1.msra.mxu0 0.0
    %73 = vmatprep.subr.mxu0 0.0
    %74 = vmatpush1.msra.mxu0 0.0
    %75 = vmatprep.subr.mxu0 0.0
    %76 = vmatpush1.msra.mxu0 0.0
    %77 = vmatprep.subr.mxu0 0.0
    %78 = vmatpush1.msra.mxu0 0.0
    %79 = vmatprep.subr.mxu0 0.0
    %80 = vmatpush1.msra.mxu0 0.0
    %81 = vmatprep.subr.mxu0 0.0
    %82 = vmatpush1.msra.mxu0 0.0
    %83 = vmatprep.subr.mxu0 0.0
    %84 = vmatpush1.msra.mxu0 0.0
    %85 = vmatprep.subr.mxu0 0.0
    %86 = vmatpush1.msra.mxu0 0.0
    %87 = vmatprep.subr.mxu0 0.0
    %88 = vmatpush1.msra.mxu0 0.0
    %89 = vmatprep.subr.mxu0 0.0
    %90 = vmatpush1.msra.mxu0 0.0
    %91 = vmatprep.subr.mxu0 0.0
    %92 = vmatpush1.msra.mxu0 0.0
    %93 = vmatprep.subr.mxu0 0.0
    %94 = vmatpush1.msra.mxu0 0.0
    %95 = vmatprep.subr.mxu0 0.0
    %96 = vmatpush1.msra.mxu0 0.0
    %97 = vmatprep.subr.mxu0 0.0
    %98 = vmatpush1.msra.mxu0 0.0
    %99 = vmatprep.subr.mxu0 0.0
    %100 = vmatpush1.msra.mxu0 0.0
    %101 = vmatprep.subr.mxu0 0.0
    %102 = vmatpush1.msra.mxu0 0.0
    %103 = vmatprep.subr.mxu0 0.0
    %104 = vmatpush1.msra.mxu0 0.0
    %105 = vmatprep.subr.mxu0 0.0
    %106 = vmatpush1.msra.mxu0 0.0
    %107 = vmatprep.subr.mxu0 0.0
    %108 = vmatpush1.msra.mxu0 0.0
    %109 = vmatprep.subr.mxu0 0.0
    %110 = vmatpush1.msra.mxu0 0.0
    %111 = vmatprep.mubr.f32.mxu0 0.0
    %112 = vmatmul.mubr.f32.gmra.mrb[0].mxu0 %v38
    %v113 = vpop.f32.mrb[0].mxu0
    %v114 = vadd.f32 %v29, %v113
    %v115 = vpop.f32.mrb[0].mxu0
    %116 = vmatprep.mubr.f32.mxu0 0.0
    %117 = vmatmul.mubr.f32.gmra.mrb[0].mxu0 %v41
    %v118 = vpop.f32.mrb[0].mxu0
    %v119 = vadd.f32 %v34, %v118
    %v120 = vpop.f32.mrb[0].mxu0
    %121 = vdwg.mxu0
    %v122 = vmax.f32 %v114, 0.0
    %v123 = vmax.f32 %v119, 0.0
    %v124 = vld [vmem:[%s3] sm:$0xff]
    %v125 = vld [vmem:[%s3 + $0x8] sm:$0xff]
    %v126 = vld [vmem:[%s4] sm:$0x3]
    %128 = vset.pattern.permute.xlu0 0
    %129 = vperm.xlu0 %128, %v124
    %v130 = vpop.permute.xlu0 %129
    %133 = vset.pattern.permute.xlu0 0
    %134 = vperm.xlu0 %133, %v125
    %v135 = vpop.permute.xlu0 %134
    %v137 = vmul.f32 %v122, %v130
    %v138 = vmul.f32 %v123, %v135
    %v139 = vadd.f32 %v137, %v138
    %v140 = vrot.slane %v139, 4
    %v141 = vadd.f32 %v139, %v140
    %v142 = vrot.slane %v141, 2
    %v143 = vadd.f32 %v141, %v142
    %v144 = vrot.slane %v143, 1
    %v145 = vadd.f32 %v143, %v144
    %147 = vset.pattern.permute.xlu0 0
    %148 = vperm.xlu0 %147, %v126
    %v149 = vpop.permute.xlu0 %148
    %v151 = vadd.f32 %v145, %v149
    %152 = vst [vmem:[#allocation2] sm:$0x1] %v151
    %153 = vset.pattern.permute.xlu0 1
    %154 = vperm.xlu0 %153, %v124
    %v155 = vpop.permute.xlu0 %154
    %157 = vset.pattern.permute.xlu0 1
    %158 = vperm.xlu0 %157, %v125
    %v159 = vpop.permute.xlu0 %158
    %v161 = vmul.f32 %v122, %v155
    %v162 = vmul.f32 %v123, %v159
    %v163 = vadd.f32 %v161, %v162
    %v164 = vrot.slane %v163, 4
    %v165 = vadd.f32 %v163, %v164
    %v166 = vrot.slane %v165, 2
    %v167 = vadd.f32 %v165, %v166
    %v168 = vrot.slane %v167, 1
    %v169 = vadd.f32 %v167, %v168
    %v170 = vadd.f32 %v169, %v149
    %171 = vst [vmem:[#allocation2] sm:$0x2] %v170
    // Predicated region
    $region22: #{tpu_custom_call.1} parent=1 // pred_check
      _
    $region23: #{tpu_custom_call.1} parent=1 // pred_check_branch
      %173 = sbr.rel (0) target = $region25
    $region24: #{tpu_custom_call.1} parent=1 // pred_region
      %s175 = ssub.s32 32, 32
      %176 = vsyncadd [#allocation3], %s175
      %s178 = sshll.u32 [#allocation2], 4
      %s179 = int_to_ptr.vmem [resolvable:$true] %s178
      %181 = dma.vmem_to_hbm [thread:$0]  %s179, 32, %s5, [#allocation3]
    $region25: #{tpu_custom_call.1} parent=1 // pred_fallthru
      _
    // Predicated region
    $region26: #{tpu_custom_call.1} parent=1 // pred_check
      _
    $region27: #{tpu_custom_call.1} parent=1 // pred_check_branch
      %183 = sbr.rel (0) target = $region29
    $region28: #{tpu_custom_call.1} parent=1 // pred_region
      %184 = dma.done [#allocation3], 32
    $region29: #{tpu_custom_call.1} parent=1 // pred_fallthru
      _
    %185 = vsyncpa [#allocation3], 1

</llo_original>
